<compile_context>
chip_gen: v7x
topology: tpu7x:2x2x1
jax: 0.10.0
libtpu: 0.0.40
codegen_flags: <defaults>
</compile_context>

<pallas_src>
import math

import jax
import jax.numpy as jnp
from jax.experimental import pallas as pl
from jax.experimental.pallas import tpu as pltpu


# ---------------------------------------------------------------------------
# small helpers
# ---------------------------------------------------------------------------
def _layernorm(v, w, b, eps=1e-5):
    mu = jnp.mean(v, axis=-1, keepdims=True)
    var = jnp.mean((v - mu) ** 2, axis=-1, keepdims=True)
    return (v - mu) * jax.lax.rsqrt(var + eps) * w + b


def _new_gelu(x):
    c = math.sqrt(2.0 / math.pi)
    return 0.5 * x * (1.0 + jnp.tanh(c * (x + 0.044715 * x * x * x)))


def _pick_tile(dim, cap):
    """Largest tile <= cap that divides dim and is a 128-multiple (or the full dim)."""
    if dim <= cap:
        return dim
    t = (cap // 128) * 128
    while t >= 128:
        if dim % t == 0:
            return t
        t -= 128
    # TODO(synk): pad awkward dims instead of falling back to the full dimension.
    return dim


def _vmem_budget():
    """Per-generation VMEM budget: 96 MiB on v5e/v6e (128 MiB physical), 48 MiB otherwise
    (safe under v7x's 64 MiB physical and on CPU/interpret)."""
    try:
        kind = jax.devices()[0].device_kind.lower()
    except Exception:  # pragma: no cover - no backend
        kind = ""
    if "v5" in kind or "v6" in kind:
        return 96 * 1024 * 1024
    return 48 * 1024 * 1024


def _const_spec(block_shape, index_map):
    """BlockSpec for a grid-invariant operand: single-buffer it so the pipeliner does not
    double its VMEM footprint.  Falls back to a plain BlockSpec on older jax."""
    try:
        return pl.BlockSpec(block_shape, index_map, pipeline_mode=pl.Buffered(1))
    except Exception:
        return pl.BlockSpec(block_shape, index_map)


# ---------------------------------------------------------------------------
# Pass A: LN1 + fused QKV projection (lane-dense (T, E) bf16 outputs)
# ---------------------------------------------------------------------------
def ln_qkv_kernel(x_ref, ln1w_ref, ln1b_ref, wqkv_ref, bqkv_ref, q_ref, k_ref, v_ref):
    E = x_ref.shape[-1]
    h = _layernorm(x_ref[...], ln1w_ref[...], ln1b_ref[...]).astype(jnp.bfloat16)
    # one weight-stationary MXU pass with N = 3E instead of three N = E passes
    y = jnp.dot(h, wqkv_ref[...], preferred_element_type=jnp.float32) + bqkv_ref[...]
    q_ref[...] = y[:, :E].astype(q_ref.dtype)
    k_ref[...] = y[:, E:2 * E].astype(k_ref.dtype)
    v_ref[...] = y[:, 2 * E:].astype(v_ref.dtype)


# ---------------------------------------------------------------------------
# Pass B: flash attention over KV tiles (masked-tile skip) + out-proj + res1 + LN2
# ---------------------------------------------------------------------------
def flash_attn_kernel(act_ref, kmap_ref,                       # scalar-prefetch (SMEM)
                      x_ref, q_ref, k_ref, v_ref, segq_ref, segk_ref,
                      wo_ref, bo_ref, ln2w_ref, ln2b_ref,
                      x1_ref, h2_ref,
                      m_sc, l_sc, acc_sc):
    qi = pl.program_id(0)
    ki = pl.program_id(1)
    H, tq, D = acc_sc.shape
    E = H * D
    scale = 1.0 / math.sqrt(D)

    @pl.when(ki == 0)
    def _init():
        m_sc[...] = jnp.full(m_sc.shape, -jnp.inf, m_sc.dtype)
        l_sc[...] = jnp.zeros(l_sc.shape, l_sc.dtype)
        acc_sc[...] = jnp.zeros(acc_sc.shape, acc_sc.dtype)

    # Skip all QK^T / exp / PV work on KV tiles whose segments cannot intersect this Q tile.
    @pl.when(act_ref[qi, ki] == 1)
    def _compute():
        tk = k_ref.shape[0]
        qh = jnp.swapaxes(q_ref[...].reshape(tq, H, D), 0, 1)    # (H, tq, D) bf16
        kh = jnp.swapaxes(k_ref[...].reshape(tk, H, D), 0, 1)    # (H, tk, D) bf16
        vh = jnp.swapaxes(v_ref[...].reshape(tk, H, D), 0, 1)    # (H, tk, D) bf16

        s = jnp.einsum('hqd,hkd->hqk', qh, kh,
                       preferred_element_type=jnp.float32) * scale       # (H, tq, tk) f32
        # block-diagonal mask from per-token segment ids; no (T,T) mask in HBM,
        # applied with a bool where (no f32 bias temp / broadcast add over H)
        mask = segq_ref[...] == segk_ref[...]                             # (tq, tk) bool
        s = jnp.where(mask[None, :, :], s, -1e9)

        m_prev = m_sc[...]
        m_new = jnp.maximum(m_prev, jnp.max(s, axis=-1, keepdims=True))
        alpha = jnp.exp(m_prev - m_new)
        p = jnp.exp(s - m_new)                                            # f32 (v5e-safe)
        l_sc[...] = alpha * l_sc[...] + jnp.sum(p, axis=-1, keepdims=True)
        acc_sc[...] = alpha * acc_sc[...] + jnp.einsum(
            'hqk,hkd->hqd', p.astype(jnp.bfloat16), vh,
            preferred_element_type=jnp.float32)
        m_sc[...] = m_new

    @pl.when(ki == pl.num_programs(1) - 1)
    def _finalize():
        o = acc_sc[...] / l_sc[...]                                       # (H, tq, D) f32
        # one XLU transpose per q-tile, then a single deep-K (tq,E)@(E,E) out-projection
        o2d = jnp.swapaxes(o, 0, 1).reshape(tq, E).astype(jnp.bfloat16)   # lane-dense
        attn = jnp.dot(o2d, wo_ref[...],
                       preferred_element_type=jnp.float32) + bo_ref[...]
        x1 = x_ref[...] + attn                                            # residual 1
        x1_ref[...] = x1.astype(x1_ref.dtype)
        h2_ref[...] = _layernorm(x1, ln2w_ref[...], ln2b_ref[...]).astype(h2_ref.dtype)


# ---------------------------------------------------------------------------
# Pass C: MLP with the 4E hidden dim streamed over a K-tiled grid axis + residual 2
# ---------------------------------------------------------------------------
def mlp_kernel(x1_ref, h2_ref, wfc_ref, bfc_ref, wproj_ref, bproj_ref, out_ref, acc_ref):
    fj = pl.program_id(1)

    @pl.when(fj == 0)
    def _init():
        acc_ref[...] = jnp.zeros(acc_ref.shape, acc_ref.dtype)

    # gelu is elementwise over the hidden dim, so per-hidden-block accumulation is exact
    f = jnp.dot(h2_ref[...], wfc_ref[...],
                preferred_element_type=jnp.float32) + bfc_ref[...]
    g = _new_gelu(f).astype(jnp.bfloat16)
    acc_ref[...] += jnp.dot(g, wproj_ref[...], preferred_element_type=jnp.float32)

    @pl.when(fj == pl.num_programs(1) - 1)
    def _finalize():
        out_ref[...] = (x1_ref[...] + acc_ref[...] + bproj_ref[...]).astype(out_ref.dtype)


# ---------------------------------------------------------------------------
# Wrapper
# ---------------------------------------------------------------------------
def block_forward(features, seg_ids, params, n_head):
    """features: (1, T, E) f32; seg_ids: (T,) int32 contiguous segment ids
    (equivalent of xformers BlockDiagonalMask.from_seqlens)."""
    _, T, E = features.shape
    H = n_head
    assert E % H == 0
    D = E // H
    x = features[0]
    vmem_limit = _vmem_budget()

    tm = _pick_tile(T, 512)        # pass A / C row tile
    tq = _pick_tile(T, 256)        # pass B query tile
    if T // tq < 2 and T >= 256:   # keep >=2 parallel q-tiles so both v7x cores get work
        tq = _pick_tile(T, max(128, tq // 2))
    tk = _pick_tile(T, 512)        # pass B kv tile
    tf = _pick_tile(4 * E, 1024)   # pass C hidden-dim tile (streams w_fc / w_proj)
    nq, nk = T // tq, T // tk
    assert T % tm == 0 and T % tq == 0 and T % tk == 0 and (4 * E) % tf == 0

    seg = seg_ids.astype(jnp.int32)
    seg_col = seg.reshape(T, 1)
    seg_row = seg.reshape(1, T)

    # per-tile segment ranges -> tile activity map + "previous active block" map for k/v DMA
    q_lo, q_hi = seg.reshape(nq, tq).min(axis=1), seg.reshape(nq, tq).max(axis=1)
    k_lo, k_hi = seg.reshape(nk, tk).min(axis=1), seg.reshape(nk, tk).max(axis=1)
    active_b = (q_lo[:, None] <= k_hi[None, :]) & (k_lo[None, :] <= q_hi[:, None])
    active = active_b.astype(jnp.int32)                                    # (nq, nk)
    kv_idx = jnp.arange(nk, dtype=jnp.int32)[None, :]
    kmap = jnp.maximum(
        jax.lax.cummax(jnp.where(active_b, kv_idx, -1), axis=1), 0
    ).astype(jnp.int32)                                                    # (nq, nk)

    # ---- pass A: LN1 + fused QKV projection ----
    flops_a = 2 * T * E * 3 * E + 10 * T * E
    bytes_a = T * E * 4 + 6 * E * E + 3 * T * E * 2 + 4 * E * 4
    q, k, v = pl.pallas_call(
        ln_qkv_kernel,
        grid=(T // tm,),
        in_specs=[
            pl.BlockSpec((tm, E), lambda i: (i, 0)),         # x
            _const_spec((1, E), lambda i: (0, 0)),           # ln1_w
            _const_spec((1, E), lambda i: (0, 0)),           # ln1_b
            _const_spec((E, 3 * E), lambda i: (0, 0)),       # w_qkv (fused)
            _const_spec((1, 3 * E), lambda i: (0, 0)),       # b_qkv
        ],
        out_specs=(pl.BlockSpec((tm, E), lambda i: (i, 0)),) * 3,
        out_shape=(jax.ShapeDtypeStruct((T, E), jnp.bfloat16),) * 3,
        compiler_params=pltpu.CompilerParams(
            dimension_semantics=("parallel",), vmem_limit_bytes=vmem_limit),
        cost_estimate=pl.CostEstimate(flops=int(flops_a), transcendentals=int(T),
                                      bytes_accessed=int(bytes_a)),
    )(x, params["ln1_w"], params["ln1_b"], params["w_qkv"], params["b_qkv"])

    # ---- pass B: flash attention + out-proj + residual 1 + LN2 ----
    flops_b = 4 * T * T * E + 2 * T * E * E
    trans_b = H * T * T
    bytes_b = 3 * T * E * 2 + T * E * 4 + 2 * E * E + T * E * 6 + 2 * T * 4
    x1, h2 = pl.pallas_call(
        flash_attn_kernel,
        grid_spec=pltpu.PrefetchScalarGridSpec(
            num_scalar_prefetch=2,
            grid=(nq, nk),
            in_specs=[
                pl.BlockSpec((tq, E), lambda qi, ki, *_: (qi, 0)),     # x (residual)
                pl.BlockSpec((tq, E), lambda qi, ki, *_: (qi, 0)),     # q
                pl.BlockSpec((tk, E),                                  # k: skip DMA on masked tiles
                             lambda qi, ki, act, kmp: (kmp[qi, ki], 0)),
                pl.BlockSpec((tk, E),                                  # v: skip DMA on masked tiles
                             lambda qi, ki, act, kmp: (kmp[qi, ki], 0)),
                pl.BlockSpec((tq, 1), lambda qi, ki, *_: (qi, 0)),     # seg ids (column)
                pl.BlockSpec((1, tk), lambda qi, ki, *_: (0, ki)),     # seg ids (row)
                _const_spec((E, E), lambda qi, ki, *_: (0, 0)),        # w_o (flat)
                _const_spec((1, E), lambda qi, ki, *_: (0, 0)),        # b_o
                _const_spec((1, E), lambda qi, ki, *_: (0, 0)),        # ln2_w
                _const_spec((1, E), lambda qi, ki, *_: (0, 0)),        # ln2_b
            ],
            out_specs=(pl.BlockSpec((tq, E), lambda qi, ki, *_: (qi, 0)),   # x1 (f32)
                       pl.BlockSpec((tq, E), lambda qi, ki, *_: (qi, 0))),  # h2 (bf16)
            scratch_shapes=[
                pltpu.VMEM((H, tq, 1), jnp.float32),    # running max
                pltpu.VMEM((H, tq, 1), jnp.float32),    # running sum
                pltpu.VMEM((H, tq, D), jnp.float32),    # output accumulator
            ],
        ),
        out_shape=(jax.ShapeDtypeStruct((T, E), jnp.float32),
                   jax.ShapeDtypeStruct((T, E), jnp.bfloat16)),
        compiler_params=pltpu.CompilerParams(
            dimension_semantics=("parallel", "arbitrary"), vmem_limit_bytes=vmem_limit),
        cost_estimate=pl.CostEstimate(flops=int(flops_b), transcendentals=int(trans_b),
                                      bytes_accessed=int(bytes_b)),
    )(active, kmap, x, q, k, v, seg_col, seg_row,
      params["w_o"], params["b_o"], params["ln2_w"], params["ln2_b"])

    # ---- pass C: MLP (hidden dim streamed) + residual 2 ----
    flops_c = 16 * T * E * E
    trans_c = 4 * T * E
    bytes_c = T * E * 6 + 16 * E * E + T * E * 4 + 5 * E * 4
    out = pl.pallas_call(
        mlp_kernel,
        grid=(T // tm, (4 * E) // tf),
        in_specs=[
            pl.BlockSpec((tm, E), lambda i, j: (i, 0)),      # x1 (residual)
            pl.BlockSpec((tm, E), lambda i, j: (i, 0)),      # h2 = LN2(x1)
            pl.BlockSpec((E, tf), lambda i, j: (0, j)),      # w_fc  (streamed over 4E)
            pl.BlockSpec((1, tf), lambda i, j: (0, j)),      # b_fc  (streamed over 4E)
            pl.BlockSpec((tf, E), lambda i, j: (j, 0)),      # w_proj (streamed over 4E)
            _const_spec((1, E), lambda i, j: (0, 0)),        # b_proj
        ],
        out_specs=pl.BlockSpec((tm, E), lambda i, j: (i, 0)),
        out_shape=jax.ShapeDtypeStruct((T, E), jnp.float32),
        scratch_shapes=[pltpu.VMEM((tm, E), jnp.float32)],
        compiler_params=pltpu.CompilerParams(
            dimension_semantics=("parallel", "arbitrary"), vmem_limit_bytes=vmem_limit),
        cost_estimate=pl.CostEstimate(flops=int(flops_c), transcendentals=int(trans_c),
                                      bytes_accessed=int(bytes_c)),
    )(x1, h2, params["w_fc"], params["b_fc"], params["w_proj"], params["b_proj"])

    return out[None, :, :]


# ---------------- parameter construction (deterministic, torch-like init) ----------------
def init_params(key, n_embd, n_head, bias=True):
    E = n_embd
    keys = jax.random.split(key, 4)

    def linear(k, fan_in, fan_out):
        bound = 1.0 / math.sqrt(fan_in)
        kw, kb = jax.random.split(k)
        w = jax.random.uniform(kw, (fan_in, fan_out), jnp.float32, -bound, bound)
        b = (jax.random.uniform(kb, (1, fan_out), jnp.float32, -bound, bound)
             if bias else jnp.zeros((1, fan_out), jnp.float32))
        return w, b

    w_qkv, b_qkv = linear(keys[0], E, 3 * E)
    w_o, b_o = linear(keys[1], E, E)
    w_fc, b_fc = linear(keys[2], E, 4 * E)
    w_proj, b_proj = linear(keys[3], 4 * E, E)

    bf = jnp.bfloat16
    return dict(
        ln1_w=jnp.ones((1, E), jnp.float32), ln1_b=jnp.zeros((1, E), jnp.float32),
        ln2_w=jnp.ones((1, E), jnp.float32), ln2_b=jnp.zeros((1, E), jnp.float32),
        w_qkv=w_qkv.astype(bf), b_qkv=b_qkv,
        w_o=w_o.astype(bf), b_o=b_o,
        w_fc=w_fc.astype(bf), b_fc=b_fc,
        w_proj=w_proj.astype(bf), b_proj=b_proj,
    )


# ---------------- pure-JAX reference (mirrors the bf16 MXU boundaries) ----------------
def reference_forward(features, seg_ids, params, n_head):
    x = features[0].astype(jnp.float32)
    T, E = x.shape
    H = n_head
    D = E // H

    def ln(v, w, b):
        mu = jnp.mean(v, -1, keepdims=True)
        var = jnp.mean((v - mu) ** 2, -1, keepdims=True)
        return (v - mu) / jnp.sqrt(var + 1e-5) * w + b

    bias = jnp.where(seg_ids[:, None] == seg_ids[None, :], 0.0, -1e9).astype(jnp.float32)

    h = ln(x, params["ln1_w"], params["ln1_b"]).astype(jnp.bfloat16)
    y = jnp.dot(h, params["w_qkv"], preferred_element_type=jnp.float32) + params["b_qkv"]
    q = y[:, :E].astype(jnp.bfloat16)
    k = y[:, E:2 * E].astype(jnp.bfloat16)
    v = y[:, 2 * E:].astype(jnp.bfloat16)

    qh = q.reshape(T, H, D).transpose(1, 0, 2)
    kh = k.reshape(T, H, D).transpose(1, 0, 2)
    vh = v.reshape(T, H, D).transpose(1, 0, 2)
    s = jnp.einsum("hqd,hkd->hqk", qh, kh, preferred_element_type=jnp.float32) / math.sqrt(D)
    s = s + bias[None]
    m = jnp.max(s, -1, keepdims=True)
    p = jnp.exp(s - m)
    l = jnp.sum(p, -1, keepdims=True)
    o = jnp.einsum("hqk,hkd->hqd", p.astype(jnp.bfloat16), vh,
                   preferred_element_type=jnp.float32) / l
    o2d = o.transpose(1, 0, 2).reshape(T, E).astype(jnp.bfloat16)

    attn = jnp.dot(o2d, params["w_o"], preferred_element_type=jnp.float32) + params["b_o"]
    x1 = x + attn

    h2 = ln(x1, params["ln2_w"], params["ln2_b"]).astype(jnp.bfloat16)
    f = jnp.dot(h2, params["w_fc"], preferred_element_type=jnp.float32) + params["b_fc"]
    g = 0.5 * f * (1.0 + jnp.tanh(math.sqrt(2.0 / math.pi) * (f + 0.044715 * f ** 3)))
    mlp = jnp.dot(g.astype(jnp.bfloat16), params["w_proj"],
                  preferred_element_type=jnp.float32) + params["b_proj"]
    return (x1 + mlp)[None]


if __name__ == "__main__":
    n_embd, n_head, T = 32, 4, 8
    key = jax.random.PRNGKey(0)
    k_feat, k_param = jax.random.split(key, 2)

    features = jax.random.normal(k_feat, (1, T, n_embd), jnp.float32)
    coords = jnp.zeros((1, T, 2), jnp.float32)   # unused: rope=False eval path
    # BlockDiagonalMask.from_seqlens([5, 3]) -> per-token segment ids
    seqlens = [5, 3]
    seg_ids = jnp.concatenate(
        [jnp.full((n,), i, jnp.int32) for i, n in enumerate(seqlens)])
    params = init_params(k_param, n_embd, n_head, bias=True)

    out = block_forward(features, seg_ids, params, n_head)
    out = jax.block_until_ready(out)

    ref = reference_forward(features, seg_ids, params, n_head)
    assert out.shape == (1, T, n_embd)
    max_err = float(jnp.max(jnp.abs(out - ref)))
    # tolerance covers bf16 MXU operands and online-softmax rescaling order
    assert jnp.allclose(out, ref, atol=2e-2, rtol=2e-2), \
        f"mismatch vs JAX reference (max abs err {max_err})"
    print("KERNEL_OK")
</pallas_src>

<mosaic_0001>
module attributes {stable_mosaic.version = 11 : i64} {
  func.func @ln_qkv_kernel(%arg0: i32, %arg1: memref<8x32xf32, #tpu.memory_space<vmem>>, %arg2: memref<1x32xf32, #tpu.memory_space<vmem>>, %arg3: memref<1x32xf32, #tpu.memory_space<vmem>>, %arg4: memref<32x96xbf16, #tpu.memory_space<vmem>>, %arg5: memref<1x96xf32, #tpu.memory_space<vmem>>, %arg6: memref<8x32xbf16, #tpu.memory_space<vmem>>, %arg7: memref<8x32xbf16, #tpu.memory_space<vmem>>, %arg8: memref<8x32xbf16, #tpu.memory_space<vmem>>) attributes {dimension_semantics = [#tpu.dimension_semantics<parallel>], iteration_bounds = array<i64: 1>, scalar_prefetch = 0 : i64, scratch_operands = 0 : i64, tpu.core_type = #tpu.core_type<tc>, window_params = [{transform_indices = @transform_0, window_bounds = array<i64: 8, 32>}, {pipeline_mode = #tpu.pipeline_mode<synchronous>, transform_indices = @transform_1, window_bounds = array<i64: 1, 32>}, {pipeline_mode = #tpu.pipeline_mode<synchronous>, transform_indices = @transform_2, window_bounds = array<i64: 1, 32>}, {pipeline_mode = #tpu.pipeline_mode<synchronous>, transform_indices = @transform_3, window_bounds = array<i64: 32, 96>}, {pipeline_mode = #tpu.pipeline_mode<synchronous>, transform_indices = @transform_4, window_bounds = array<i64: 1, 96>}, {transform_indices = @transform_5, window_bounds = array<i64: 8, 32>}, {transform_indices = @transform_6, window_bounds = array<i64: 8, 32>}, {transform_indices = @transform_7, window_bounds = array<i64: 8, 32>}]} {
    %c0 = arith.constant 0 : index
    %c0_0 = arith.constant 0 : index
    %0 = vector.load %arg1[%c0, %c0_0] : memref<8x32xf32, #tpu.memory_space<vmem>>, vector<8x32xf32>
    %c0_1 = arith.constant 0 : index
    %c0_2 = arith.constant 0 : index
    %1 = vector.load %arg2[%c0_1, %c0_2] : memref<1x32xf32, #tpu.memory_space<vmem>>, vector<1x32xf32>
    %c0_3 = arith.constant 0 : index
    %c0_4 = arith.constant 0 : index
    %2 = vector.load %arg3[%c0_3, %c0_4] : memref<1x32xf32, #tpu.memory_space<vmem>>, vector<1x32xf32>
    %cst = arith.constant dense<0.000000e+00> : vector<8xf32>
    %3 = vector.multi_reduction <add>, %0, %cst [1] : vector<8x32xf32> to vector<8xf32>
    %4 = vector.shape_cast %3 : vector<8xf32> to vector<8x1xf32>
    %cst_5 = arith.constant 3.200000e+01 : f32
    %5 = vector.broadcast %cst_5 : f32 to vector<8x1xf32>
    %6 = arith.divf %4, %5 : vector<8x1xf32>
    %7 = vector.broadcast %6 : vector<8x1xf32> to vector<8x32xf32>
    %8 = arith.subf %0, %7 : vector<8x32xf32>
    %9 = arith.mulf %8, %8 : vector<8x32xf32>
    %cst_6 = arith.constant dense<0.000000e+00> : vector<8xf32>
    %10 = vector.multi_reduction <add>, %9, %cst_6 [1] : vector<8x32xf32> to vector<8xf32>
    %11 = vector.shape_cast %10 : vector<8xf32> to vector<8x1xf32>
    %cst_7 = arith.constant 3.200000e+01 : f32
    %12 = vector.broadcast %cst_7 : f32 to vector<8x1xf32>
    %13 = arith.divf %11, %12 : vector<8x1xf32>
    %14 = vector.broadcast %6 : vector<8x1xf32> to vector<8x32xf32>
    %15 = arith.subf %0, %14 : vector<8x32xf32>
    %cst_8 = arith.constant 9.99999974E-6 : f32
    %16 = vector.broadcast %cst_8 : f32 to vector<8x1xf32>
    %17 = arith.addf %13, %16 : vector<8x1xf32>
    %18 = math.rsqrt %17 : vector<8x1xf32>
    %19 = vector.broadcast %18 : vector<8x1xf32> to vector<8x32xf32>
    %20 = arith.mulf %15, %19 : vector<8x32xf32>
    %21 = vector.broadcast %1 : vector<1x32xf32> to vector<8x32xf32>
    %22 = arith.mulf %20, %21 : vector<8x32xf32>
    %23 = vector.broadcast %2 : vector<1x32xf32> to vector<8x32xf32>
    %24 = arith.addf %22, %23 : vector<8x32xf32>
    %25 = arith.truncf %24 : vector<8x32xf32> to vector<8x32xbf16>
    %c0_9 = arith.constant 0 : index
    %c0_10 = arith.constant 0 : index
    %26 = vector.load %arg4[%c0_9, %c0_10] : memref<32x96xbf16, #tpu.memory_space<vmem>>, vector<32x96xbf16>
    %cst_11 = arith.constant dense<0.000000e+00> : vector<8x96xf32>
    %27 = tpu.matmul %25, %26, %cst_11 {dimension_numbers = #tpu.dot_dimension_numbers<[1], [0], [0], [1], [0, 0, 1, 1], [], []>} : vector<8x32xbf16>, vector<32x96xbf16>, vector<8x96xf32> -> vector<8x96xf32>
    %c0_12 = arith.constant 0 : index
    %c0_13 = arith.constant 0 : index
    %28 = vector.load %arg5[%c0_12, %c0_13] : memref<1x96xf32, #tpu.memory_space<vmem>>, vector<1x96xf32>
    %29 = vector.broadcast %28 : vector<1x96xf32> to vector<8x96xf32>
    %30 = arith.addf %27, %29 : vector<8x96xf32>
    %31 = vector.extract_strided_slice %30 {offsets = [0, 0], sizes = [8, 32], strides = [1, 1]} : vector<8x96xf32> to vector<8x32xf32>
    %32 = arith.truncf %31 : vector<8x32xf32> to vector<8x32xbf16>
    %c0_14 = arith.constant 0 : index
    %c0_15 = arith.constant 0 : index
    %33 = vector.load %arg6[%c0_14, %c0_15] : memref<8x32xbf16, #tpu.memory_space<vmem>>, vector<8x32xbf16>
    tpu.vector_store %arg6[%c0_14, %c0_15], %32 {strides = array<i32>} : memref<8x32xbf16, #tpu.memory_space<vmem>>, vector<8x32xbf16>,
    %34 = vector.extract_strided_slice %30 {offsets = [0, 32], sizes = [8, 32], strides = [1, 1]} : vector<8x96xf32> to vector<8x32xf32>
    %35 = arith.truncf %34 : vector<8x32xf32> to vector<8x32xbf16>
    %c0_16 = arith.constant 0 : index
    %c0_17 = arith.constant 0 : index
    %36 = vector.load %arg7[%c0_16, %c0_17] : memref<8x32xbf16, #tpu.memory_space<vmem>>, vector<8x32xbf16>
    tpu.vector_store %arg7[%c0_16, %c0_17], %35 {strides = array<i32>} : memref<8x32xbf16, #tpu.memory_space<vmem>>, vector<8x32xbf16>,
    %37 = vector.extract_strided_slice %30 {offsets = [0, 64], sizes = [8, 32], strides = [1, 1]} : vector<8x96xf32> to vector<8x32xf32>
    %38 = arith.truncf %37 : vector<8x32xf32> to vector<8x32xbf16>
    %c0_18 = arith.constant 0 : index
    %c0_19 = arith.constant 0 : index
    %39 = vector.load %arg8[%c0_18, %c0_19] : memref<8x32xbf16, #tpu.memory_space<vmem>>, vector<8x32xbf16>
    tpu.vector_store %arg8[%c0_18, %c0_19], %38 {strides = array<i32>} : memref<8x32xbf16, #tpu.memory_space<vmem>>, vector<8x32xbf16>,
    return
  }
  func.func @transform_0(%arg0: i32) -> (i32, i32) {
    %c0_i32 = arith.constant 0 : i32
    %c0_i32_0 = arith.constant 0 : i32
    return %arg0, %c0_i32 : i32, i32
  }
  func.func @transform_1(%arg0: i32) -> (i32, i32) {
    %c0_i32 = arith.constant 0 : i32
    %c0_i32_0 = arith.constant 0 : i32
    %c0_i32_1 = arith.constant 0 : i32
    return %c0_i32, %c0_i32_0 : i32, i32
  }
  func.func @transform_2(%arg0: i32) -> (i32, i32) {
    %c0_i32 = arith.constant 0 : i32
    %c0_i32_0 = arith.constant 0 : i32
    %c0_i32_1 = arith.constant 0 : i32
    return %c0_i32, %c0_i32_0 : i32, i32
  }
  func.func @transform_3(%arg0: i32) -> (i32, i32) {
    %c0_i32 = arith.constant 0 : i32
    %c0_i32_0 = arith.constant 0 : i32
    %c0_i32_1 = arith.constant 0 : i32
    return %c0_i32, %c0_i32_0 : i32, i32
  }
  func.func @transform_4(%arg0: i32) -> (i32, i32) {
    %c0_i32 = arith.constant 0 : i32
    %c0_i32_0 = arith.constant 0 : i32
    %c0_i32_1 = arith.constant 0 : i32
    return %c0_i32, %c0_i32_0 : i32, i32
  }
  func.func @transform_5(%arg0: i32) -> (i32, i32) {
    %c0_i32 = arith.constant 0 : i32
    %c0_i32_0 = arith.constant 0 : i32
    return %arg0, %c0_i32 : i32, i32
  }
  func.func @transform_6(%arg0: i32) -> (i32, i32) {
    %c0_i32 = arith.constant 0 : i32
    %c0_i32_0 = arith.constant 0 : i32
    return %arg0, %c0_i32 : i32, i32
  }
  func.func @transform_7(%arg0: i32) -> (i32, i32) {
    %c0_i32 = arith.constant 0 : i32
    %c0_i32_0 = arith.constant 0 : i32
    return %arg0, %c0_i32 : i32, i32
  }
}

</mosaic_0001>

<llo_original>
// kernel: tpu_custom_call.1
$region0: #{tpu_custom_call.1}
  #allocation0 [shape = 'u32[]', space=smem, size = 0x4, offset = 0x4, fixed_abs, tag = 'smem constant byte address 0x4 - core index']
  #allocation1 [shape = 'u32[144,128]{1,0:T(1,128)}', space=vmem, size = 0x12000, scoped, tag = 'internal scratch']
  %s0 = inlined_call_operand.hbm [shape: f32[8,32], index: 0, kind: input, shape index: {}]
  %s1 = inlined_call_operand.vmem [shape: f32[1,32], index: 1, kind: input, shape index: {}]
  %s2 = inlined_call_operand.vmem [shape: f32[1,32], index: 2, kind: input, shape index: {}]
  %s3 = inlined_call_operand.hbm [shape: bf16[32,96], index: 3, kind: input, shape index: {}]
  %s4 = inlined_call_operand.vmem [shape: f32[1,96], index: 4, kind: input, shape index: {}]
  %s5 = inlined_call_operand.hbm [shape: bf16[8,32], index: 5, kind: output, shape index: {0}]
  %s6 = inlined_call_operand.hbm [shape: bf16[8,32], index: 6, kind: output, shape index: {1}]
  %s7 = inlined_call_operand.hbm [shape: bf16[8,32], index: 7, kind: output, shape index: {2}]
  %8 = xla_tuple %s5, %s6, %s7
  %s9 = sld [smem:[#allocation0]]
  $region54: #{tpu_custom_call.1} parent=0
    _
  %s11 = ssub.s32 1, %s9
  %s12 = scalar_select 0, %s11, %s9
  $region1: #{tpu_custom_call.1} parent=0
    #allocation2 [shape = 'u8[4096]{0}', space=vmem, size = 0x1000, scoped, tag = 'input window, operand 0, single buffered']
    #allocation3 [shape = 's32[1]{0}', space=sflag, size = 0x4, scoped, tag = 'scoped memory for tpu_custom_call.1']
    #allocation4 [shape = 's32[1]{0}', space=sflag, size = 0x4, scoped, tag = 'scoped memory for tpu_custom_call.1']
    #allocation5 [shape = 'u8[8192]{0}', space=vmem, size = 0x2000, scoped, tag = 'input window, operand 3, single buffered']
    #allocation6 [shape = 's32[1]{0}', space=sflag, size = 0x4, scoped, tag = 'scoped memory for tpu_custom_call.1']
    #allocation7 [shape = 'u8[2048]{0}', space=vmem, size = 0x800, scoped, tag = 'output window, operand 0, single buffered']
    #allocation8 [shape = 'u8[2048]{0}', space=vmem, size = 0x800, scoped, tag = 'output window, operand 1, single buffered']
    #allocation9 [shape = 's32[1]{0}', space=sflag, size = 0x4, scoped, tag = 'scoped memory for tpu_custom_call.1']
    #allocation10 [shape = 'u8[2048]{0}', space=vmem, size = 0x800, scoped, tag = 'output window, operand 2, single buffered']
    %13 = vsyncpa [#allocation3], 0
    %14 = vsyncpa [#allocation6], 0
    %15 = vsyncpa [#allocation4], 0
    %16 = vsyncpa [#allocation9], 0
    // Predicated region
    $region2: #{tpu_custom_call.1} parent=1 // pred_check
      _
    $region3: #{tpu_custom_call.1} parent=1 // pred_check_branch
      %18 = sbr.rel (0) target = $region5
    $region4: #{tpu_custom_call.1} parent=1 // pred_region
      %s20 = ssub.s32 128, 128
      %21 = vsyncadd [#allocation3], %s20
      %s23 = sshll.u32 [#allocation2], 4
      %s24 = int_to_ptr.vmem [resolvable:$true] %s23
      %26 = dma.hbm_to_vmem [thread:$0]  %s0, 128, %s24, [#allocation3]
    $region5: #{tpu_custom_call.1} parent=1 // pred_fallthru
      _
    // Predicated region
    $region6: #{tpu_custom_call.1} parent=1 // pred_check
      _
    $region7: #{tpu_custom_call.1} parent=1 // pred_check_branch
      %28 = sbr.rel (0) target = $region9
    $region8: #{tpu_custom_call.1} parent=1 // pred_region
      _
    $region9: #{tpu_custom_call.1} parent=1 // pred_fallthru
      _
    // Predicated region
    $region10: #{tpu_custom_call.1} parent=1 // pred_check
      _
    $region11: #{tpu_custom_call.1} parent=1 // pred_check_branch
      %30 = sbr.rel (0) target = $region13
    $region12: #{tpu_custom_call.1} parent=1 // pred_region
      _
    $region13: #{tpu_custom_call.1} parent=1 // pred_fallthru
      _
    // Predicated region
    $region14: #{tpu_custom_call.1} parent=1 // pred_check
      _
    $region15: #{tpu_custom_call.1} parent=1 // pred_check_branch
      %32 = sbr.rel (0) target = $region17
    $region16: #{tpu_custom_call.1} parent=1 // pred_region
      %s34 = ssub.s32 256, 256
      %35 = vsyncadd [#allocation6], %s34
      %s36 = sshll.u32 [#allocation5], 4
      %s37 = int_to_ptr.vmem [resolvable:$true] %s36
      %42 = dma.hbm_to_vmem [thread:$0]  %s3, 256, %s37, [#allocation6], 64, 64, 4
    $region17: #{tpu_custom_call.1} parent=1 // pred_fallthru
      _
    // Predicated region
    $region18: #{tpu_custom_call.1} parent=1 // pred_check
      _
    $region19: #{tpu_custom_call.1} parent=1 // pred_check_branch
      %44 = sbr.rel (0) target = $region21
    $region20: #{tpu_custom_call.1} parent=1 // pred_region
      _
    $region21: #{tpu_custom_call.1} parent=1 // pred_fallthru
      _
    // Predicated region
    $region22: #{tpu_custom_call.1} parent=1 // pred_check
      _
    $region23: #{tpu_custom_call.1} parent=1 // pred_check_branch
      %46 = sbr.rel (0) target = $region25
    $region24: #{tpu_custom_call.1} parent=1 // pred_region
      %47 = dma.done [#allocation3], 128
    $region25: #{tpu_custom_call.1} parent=1 // pred_fallthru
      _
    // Predicated region
    $region26: #{tpu_custom_call.1} parent=1 // pred_check
      _
    $region27: #{tpu_custom_call.1} parent=1 // pred_check_branch
      %49 = sbr.rel (0) target = $region29
    $region28: #{tpu_custom_call.1} parent=1 // pred_region
      %50 = dma.done [#allocation6], 256
    $region29: #{tpu_custom_call.1} parent=1 // pred_fallthru
      _
    %v52 = vld [vmem:[#allocation2] sm:$0xff]
    %v53 = vld [vmem:[%s1] sm:$0x1]
    %v54 = vld [vmem:[%s2] sm:$0x1]
    %vm55 = vcmask 261120
    %v56 = vsel %vm55, %v52, 0.0
    %57 = vadd.xlane.f32.xlu0 %v56
    %v58 = vpop.xlane.xlu0 %57
    %v59 = vrcp.pop 32.0
    %v60 = vmul.f32 %v58, %v59
    %v61 = vsub.f32 %v52, %v60
    %v62 = vmul.f32 %v61, %v61
    %v63 = vsel %vm55, %v62, 0.0
    %64 = vadd.xlane.f32.xlu0 %v63
    %v65 = vpop.xlane.xlu0 %64
    %v66 = vmul.f32 %v65, %v59
    %v67 = vadd.f32 %v66, 1e-05
    %v68 = vrsqrt.pop %v67
    %v69 = vmul.f32 %v61, %v68
    %v71 = vlaneseq
    %v72 = vshrl.u32 %v71, 7
    %v73 = vsub.s32 0, %v72
    %v74 = vrot.slane %v53, %v73
    %v76 = vmul.f32 %v69, %v74
    %v78 = vlaneseq
    %v79 = vshrl.u32 %v78, 7
    %v80 = vsub.s32 0, %v79
    %v81 = vrot.slane %v54, %v80
    %v83 = vadd.f32 %v76, %v81
    %v84 = vpack.c.bf16 %v83, %v83
    %v85 = vld [vmem:[#allocation5] sm:$0xf]
    %v86 = vld [vmem:[#allocation5 + $0x4] sm:$0xf]
    %v87 = vld [vmem:[#allocation5 + $0x8] sm:$0xf]
    %v88 = vld [vmem:[#allocation5 + $0xc] sm:$0xf]
    %v89 = vld [vmem:[%s4] sm:$0x1]
    %v91 = vlaneseq
    %v92 = vshrl.u32 %v91, 7
    %v93 = vsub.s32 0, %v92
    %v94 = vrot.slane %v89, %v93
    %v100 = vunpack.c.l.b16 %v85
    %v101 = vunpack.c.l.b16 %v86
    %v102 = vunpack.c.l.b16 %v87
    %v103 = vunpack.c.l.b16 %v88
    %v104 = vpack.c.b16 %v101, %v100
    %v105 = vpack.c.b16 %v103, %v102
    %v109 = vsel %vm55, %v84, 0
    %111 = vmatprep.subr.bf16.mxu0 0
    %112 = vmatpush1.bf16.msra.mxu0 %v104
    %113 = vmatprep.subr.bf16.mxu0 0
    %114 = vmatpush1.bf16.msra.mxu0 %v105
    %115 = vmatprep.subr.bf16.mxu0 0
    %116 = vmatpush1.bf16.msra.mxu0 0
    %117 = vmatprep.subr.bf16.mxu0 0
    %118 = vmatpush1.bf16.msra.mxu0 0
    %119 = vmatprep.subr.bf16.mxu0 0
    %120 = vmatpush1.bf16.msra.mxu0 0
    %121 = vmatprep.subr.bf16.mxu0 0
    %122 = vmatpush1.bf16.msra.mxu0 0
    %123 = vmatprep.subr.bf16.mxu0 0
    %124 = vmatpush1.bf16.msra.mxu0 0
    %125 = vmatprep.subr.bf16.mxu0 0
    %126 = vmatpush1.bf16.msra.mxu0 0
    %127 = vmatprep.subr.bf16.mxu0 0
    %128 = vmatpush1.bf16.msra.mxu0 0
    %129 = vmatprep.subr.bf16.mxu0 0
    %130 = vmatpush1.bf16.msra.mxu0 0
    %131 = vmatprep.subr.bf16.mxu0 0
    %132 = vmatpush1.bf16.msra.mxu0 0
    %133 = vmatprep.subr.bf16.mxu0 0
    %134 = vmatpush1.bf16.msra.mxu0 0
    %135 = vmatprep.subr.bf16.mxu0 0
    %136 = vmatpush1.bf16.msra.mxu0 0
    %137 = vmatprep.subr.bf16.mxu0 0
    %138 = vmatpush1.bf16.msra.mxu0 0
    %139 = vmatprep.subr.bf16.mxu0 0
    %140 = vmatpush1.bf16.msra.mxu0 0
    %141 = vmatprep.subr.bf16.mxu0 0
    %142 = vmatpush1.bf16.msra.mxu0 0
    %143 = vmatprep.mubr.bf16.mxu0 0
    %144 = vmatmul.mubr.bf16.gmra.mrb[0].mxu0 %v109
    %v145 = vpop.f32.mrb[0].mxu0
    %v146 = vadd.f32 %v94, %v145
    %v147 = vpop.f32.mrb[0].mxu0
    %v148 = vpop.f32.mrb[0].mxu0
    %v149 = vpop.f32.mrb[0].mxu0
    %150 = vdwg.mxu0
    %v151 = vpack.c.bf16 %v146, %v146
    %vm152 = vcmask 257024
    %153 = vst.msk [vmem:[#allocation7] sm:$0xf] %vm152, %v151
    %v155 = vunpack.c.l.b16 %v151
    %v156 = vpack.c.b16 %v155, %v155
    %157 = vrot.lane.b32.xlu0 %v156, 96
    %v158 = vpop.permute.xlu0 %157
    %160 = vst.msk [vmem:[#allocation8] sm:$0xf] %vm152, %v158
    %161 = vrot.lane.b32.xlu0 %v156, 64
    %v162 = vpop.permute.xlu0 %161
    %164 = vst.msk [vmem:[#allocation10] sm:$0xf] %vm152, %v162
    // Predicated region
    $region30: #{tpu_custom_call.1} parent=1 // pred_check
      _
    $region31: #{tpu_custom_call.1} parent=1 // pred_check_branch
      %166 = sbr.rel (0) target = $region33
    $region32: #{tpu_custom_call.1} parent=1 // pred_region
      %s168 = ssub.s32 64, 64
      %169 = vsyncadd [#allocation4], %s168
      %s171 = sshll.u32 [#allocation7], 4
      %s172 = int_to_ptr.vmem [resolvable:$true] %s171
      %174 = dma.vmem_to_hbm [thread:$0]  %s172, 64, %s5, [#allocation4]
    $region33: #{tpu_custom_call.1} parent=1 // pred_fallthru
      _
    // Predicated region
    $region34: #{tpu_custom_call.1} parent=1 // pred_check
      _
    $region35: #{tpu_custom_call.1} parent=1 // pred_check_branch
      %176 = sbr.rel (0) target = $region37
    $region36: #{tpu_custom_call.1} parent=1 // pred_region
      %s178 = ssub.s32 64, 64
      %179 = vsyncadd [#allocation9], %s178
      %s181 = sshll.u32 [#allocation8], 4
      %s182 = int_to_ptr.vmem [resolvable:$true] %s181
      %184 = dma.vmem_to_hbm [thread:$0]  %s182, 64, %s6, [#allocation9]
    $region37: #{tpu_custom_call.1} parent=1 // pred_fallthru
      _
    // Predicated region
    $region38: #{tpu_custom_call.1} parent=1 // pred_check
      _
    $region39: #{tpu_custom_call.1} parent=1 // pred_check_branch
      %186 = sbr.rel (0) target = $region41
    $region40: #{tpu_custom_call.1} parent=1 // pred_region
      %s188 = ssub.s32 64, 64
      %189 = vsyncadd [#allocation9], %s188
      %s191 = sshll.u32 [#allocation10], 4
      %s192 = int_to_ptr.vmem [resolvable:$true] %s191
      %194 = dma.vmem_to_hbm [thread:$0]  %s192, 64, %s7, [#allocation9]
    $region41: #{tpu_custom_call.1} parent=1 // pred_fallthru
      _
    // Predicated region
    $region42: #{tpu_custom_call.1} parent=1 // pred_check
      _
    $region43: #{tpu_custom_call.1} parent=1 // pred_check_branch
      %196 = sbr.rel (0) target = $region45
    $region44: #{tpu_custom_call.1} parent=1 // pred_region
      %197 = dma.done [#allocation4], 64
    $region45: #{tpu_custom_call.1} parent=1 // pred_fallthru
      _
    // Predicated region
    $region46: #{tpu_custom_call.1} parent=1 // pred_check
      _
    $region47: #{tpu_custom_call.1} parent=1 // pred_check_branch
      %199 = sbr.rel (0) target = $region49
    $region48: #{tpu_custom_call.1} parent=1 // pred_region
      %200 = dma.done [#allocation9], 64
    $region49: #{tpu_custom_call.1} parent=1 // pred_fallthru
      _
    // Predicated region
    $region50: #{tpu_custom_call.1} parent=1 // pred_check
      _
    $region51: #{tpu_custom_call.1} parent=1 // pred_check_branch
      %202 = sbr.rel (0) target = $region53
    $region52: #{tpu_custom_call.1} parent=1 // pred_region
      %203 = dma.done [#allocation9], 64
    $region53: #{tpu_custom_call.1} parent=1 // pred_fallthru
      _
    %204 = vsyncpa [#allocation3], 1
    %205 = vsyncpa [#allocation6], 1
    %206 = vsyncpa [#allocation4], 1
    %207 = vsyncpa [#allocation9], 1

</llo_original>
